<compile_context>
chip_gen: v5e
topology: v5e:2x2
jax: 0.10.0
libtpu: 0.0.40
codegen_flags: <defaults>
</compile_context>

<pallas_src>
import functools

import jax
import jax.numpy as jnp
from jax.experimental import pallas as pl
from jax.experimental.pallas import tpu as pltpu

SUBLANE = 8          # TPU sublane width (second-to-last dim granularity)
NEG_SLOPE = 0.01     # PyTorch nn.LeakyReLU default negative_slope


def _round_up(x: int, m: int) -> int:
    return (x + m - 1) // m * m


def _qmodel_kernel(x_ref, w1_ref, b1_ref, w2_ref, b2_ref, o_ref):
    # First linear: (tb, in) @ (in, hid) + (1, hid)
    h = jnp.dot(x_ref[...], w1_ref[...], preferred_element_type=jnp.float32)
    h = h + b1_ref[...]
    # LeakyReLU (negative_slope = 0.01)
    h = jnp.where(h > 0, h, NEG_SLOPE * h)
    # Second linear: (tb, hid) @ (hid, out) + (1, out)
    out = jnp.dot(h, w2_ref[...], preferred_element_type=jnp.float32)
    out = out + b2_ref[...]
    o_ref[...] = out.astype(o_ref.dtype)


@functools.partial(jax.jit, static_argnames=("batch_tile",))
def qmodel_forward(x, w1, b1, w2, b2, *, batch_tile=4096):
    """Fused MLP forward: (x @ w1 + b1) -> LeakyReLU -> (@ w2 + b2).

    x:  (B, input_dim)           float32
    w1: (input_dim, hidden)      float32   (PyTorch weight, transposed)
    b1: (1, hidden)              float32
    w2: (hidden, output_dim)     float32
    b2: (1, output_dim)          float32
    returns (B, output_dim)      float32
    """
    B, in_dim = x.shape
    hid = w1.shape[1]
    out_dim = w2.shape[1]

    # Batch tile: multiple of 8 rows, capped, and sized so the grid has >= 2
    # steps whenever B > 8 (lets the "parallel" axis feed both v7x TensorCores).
    tb = max(SUBLANE, min(batch_tile, _round_up(pl.cdiv(B, 2), SUBLANE)))
    grid = (pl.cdiv(B, tb),)
    # NOTE: if B % tb != 0, the last block's out-of-bounds rows are computed on
    # unspecified data and discarded on writeback -- correct (no cross-row
    # reduction); nothing reads those rows.

    cost = pl.CostEstimate(
        flops=2 * B * (in_dim * hid + hid * out_dim),
        transcendentals=0,
        bytes_accessed=4 * (B * in_dim + B * out_dim
                            + in_dim * hid + hid * out_dim + hid + out_dim),
    )

    return pl.pallas_call(
        _qmodel_kernel,
        out_shape=jax.ShapeDtypeStruct((B, out_dim), jnp.float32),
        grid=grid,
        in_specs=[
            pl.BlockSpec((tb, in_dim), lambda i: (i, 0)),      # x: streamed per tile
            pl.BlockSpec((in_dim, hid), lambda i: (0, 0)),     # w1: VMEM-resident
            pl.BlockSpec((1, hid), lambda i: (0, 0)),          # b1: VMEM-resident
            pl.BlockSpec((hid, out_dim), lambda i: (0, 0)),    # w2: VMEM-resident
            pl.BlockSpec((1, out_dim), lambda i: (0, 0)),      # b2: VMEM-resident
        ],
        out_specs=pl.BlockSpec((tb, out_dim), lambda i: (i, 0)),
        compiler_params=pltpu.CompilerParams(
            dimension_semantics=("parallel",),  # megacore-shardable batch axis
        ),
        cost_estimate=cost,
    )(x.astype(jnp.float32), w1, b1, w2, b2)


def init_params(key, input_dim, hidden_dim, output_dim):
    """Deterministic init, already in kernel layout (weights transposed,
    biases (1, N)) so the forward path has zero per-call parameter prep."""
    k1, k2, k3, k4 = jax.random.split(key, 4)
    lim1 = 1.0 / jnp.sqrt(jnp.float32(input_dim))
    lim2 = 1.0 / jnp.sqrt(jnp.float32(hidden_dim))
    w1 = jax.random.uniform(k1, (input_dim, hidden_dim), jnp.float32, -lim1, lim1)
    b1 = jax.random.uniform(k2, (1, hidden_dim), jnp.float32, -lim1, lim1)
    w2 = jax.random.uniform(k3, (hidden_dim, output_dim), jnp.float32, -lim2, lim2)
    b2 = jax.random.uniform(k4, (1, output_dim), jnp.float32, -lim2, lim2)
    return w1, b1, w2, b2


def _ref_forward(x, w1, b1, w2, b2):
    h = x @ w1 + b1
    h = jnp.where(h > 0, h, NEG_SLOPE * h)
    return h @ w2 + b2


if __name__ == "__main__":
    # QModel(input_dim=16, hidden_dims=[32], output_dim=4).
    input_dim, hidden_dim, output_dim = 16, 32, 4

    key = jax.random.PRNGKey(0)
    kx1, kx2, kp = jax.random.split(key, 3)
    w1, b1, w2, b2 = init_params(kp, input_dim, hidden_dim, output_dim)

    # Case 1: batched evaluation, B multiple of 8 -> grid of 2 even tiles.
    x_big = jax.random.normal(kx1, (64, input_dim), jnp.float32)
    out_big = jax.block_until_ready(qmodel_forward(x_big, w1, b1, w2, b2))
    ref_big = _ref_forward(x_big, w1, b1, w2, b2)
    assert out_big.shape == (64, output_dim)
    assert jnp.allclose(out_big, ref_big, atol=1e-5, rtol=1e-5)

    # Case 2: ragged batch (exercises the discarded-OOB-rows tail block path).
    x_small = jax.random.normal(kx2, (10, input_dim), jnp.float32)
    out_small = jax.block_until_ready(qmodel_forward(x_small, w1, b1, w2, b2))
    ref_small = _ref_forward(x_small, w1, b1, w2, b2)
    assert out_small.shape == (10, output_dim)
    assert jnp.allclose(out_small, ref_small, atol=1e-5, rtol=1e-5)

    # TODO(synk): get_move()'s epsilon-greedy sampling / argmax and save() are
    # host-side control flow outside the forward pass and are not kernelized.

    print("KERNEL_OK")
</pallas_src>

<mosaic_0001>
module attributes {stable_mosaic.version = 11 : i64} {
  func.func @_qmodel_kernel(%arg0: i32, %arg1: memref<32x16xf32, #tpu.memory_space<vmem>>, %arg2: memref<16x32xf32, #tpu.memory_space<vmem>>, %arg3: memref<1x32xf32, #tpu.memory_space<vmem>>, %arg4: memref<32x4xf32, #tpu.memory_space<vmem>>, %arg5: memref<1x4xf32, #tpu.memory_space<vmem>>, %arg6: memref<32x4xf32, #tpu.memory_space<vmem>>) attributes {dimension_semantics = [#tpu.dimension_semantics<parallel>], iteration_bounds = array<i64: 2>, scalar_prefetch = 0 : i64, scratch_operands = 0 : i64, tpu.core_type = #tpu.core_type<tc>, window_params = [{transform_indices = @transform_0, window_bounds = array<i64: 32, 16>}, {pipeline_mode = #tpu.pipeline_mode<synchronous>, transform_indices = @transform_1, window_bounds = array<i64: 16, 32>}, {pipeline_mode = #tpu.pipeline_mode<synchronous>, transform_indices = @transform_2, window_bounds = array<i64: 1, 32>}, {pipeline_mode = #tpu.pipeline_mode<synchronous>, transform_indices = @transform_3, window_bounds = array<i64: 32, 4>}, {pipeline_mode = #tpu.pipeline_mode<synchronous>, transform_indices = @transform_4, window_bounds = array<i64: 1, 4>}, {transform_indices = @transform_5, window_bounds = array<i64: 32, 4>}]} {
    %c0 = arith.constant 0 : index
    %c0_0 = arith.constant 0 : index
    %0 = vector.load %arg1[%c0, %c0_0] : memref<32x16xf32, #tpu.memory_space<vmem>>, vector<32x16xf32>
    %c0_1 = arith.constant 0 : index
    %c0_2 = arith.constant 0 : index
    %1 = vector.load %arg2[%c0_1, %c0_2] : memref<16x32xf32, #tpu.memory_space<vmem>>, vector<16x32xf32>
    %cst = arith.constant dense<0.000000e+00> : vector<32x32xf32>
    %2 = tpu.matmul %0, %1, %cst {dimension_numbers = #tpu.dot_dimension_numbers<[1], [0], [0], [1], [0, 0, 1, 1], [], []>} : vector<32x16xf32>, vector<16x32xf32>, vector<32x32xf32> -> vector<32x32xf32>
    %c0_3 = arith.constant 0 : index
    %c0_4 = arith.constant 0 : index
    %3 = vector.load %arg3[%c0_3, %c0_4] : memref<1x32xf32, #tpu.memory_space<vmem>>, vector<1x32xf32>
    %4 = vector.broadcast %3 : vector<1x32xf32> to vector<32x32xf32>
    %5 = arith.addf %2, %4 : vector<32x32xf32>
    %cst_5 = arith.constant 0.000000e+00 : f32
    %6 = vector.broadcast %cst_5 : f32 to vector<32x32xf32>
    %7 = arith.cmpf ogt, %5, %6 : vector<32x32xf32>
    %cst_6 = arith.constant 0.00999999977 : f32
    %8 = vector.broadcast %cst_6 : f32 to vector<32x32xf32>
    %9 = arith.mulf %8, %5 : vector<32x32xf32>
    %10 = arith.select %7, %5, %9 : vector<32x32xi1>, vector<32x32xf32>
    %c0_7 = arith.constant 0 : index
    %c0_8 = arith.constant 0 : index
    %11 = vector.load %arg4[%c0_7, %c0_8] : memref<32x4xf32, #tpu.memory_space<vmem>>, vector<32x4xf32>
    %cst_9 = arith.constant dense<0.000000e+00> : vector<32x4xf32>
    %12 = tpu.matmul %10, %11, %cst_9 {dimension_numbers = #tpu.dot_dimension_numbers<[1], [0], [0], [1], [0, 0, 1, 1], [], []>} : vector<32x32xf32>, vector<32x4xf32>, vector<32x4xf32> -> vector<32x4xf32>
    %c0_10 = arith.constant 0 : index
    %c0_11 = arith.constant 0 : index
    %13 = vector.load %arg5[%c0_10, %c0_11] : memref<1x4xf32, #tpu.memory_space<vmem>>, vector<1x4xf32>
    %14 = vector.broadcast %13 : vector<1x4xf32> to vector<32x4xf32>
    %15 = arith.addf %12, %14 : vector<32x4xf32>
    %c0_12 = arith.constant 0 : index
    %c0_13 = arith.constant 0 : index
    %16 = vector.load %arg6[%c0_12, %c0_13] : memref<32x4xf32, #tpu.memory_space<vmem>>, vector<32x4xf32>
    tpu.vector_store %arg6[%c0_12, %c0_13], %15 {strides = array<i32>} : memref<32x4xf32, #tpu.memory_space<vmem>>, vector<32x4xf32>,
    return
  }
  func.func @transform_0(%arg0: i32) -> (i32, i32) {
    %c0_i32 = arith.constant 0 : i32
    %c0_i32_0 = arith.constant 0 : i32
    return %arg0, %c0_i32 : i32, i32
  }
  func.func @transform_1(%arg0: i32) -> (i32, i32) {
    %c0_i32 = arith.constant 0 : i32
    %c0_i32_0 = arith.constant 0 : i32
    %c0_i32_1 = arith.constant 0 : i32
    return %c0_i32, %c0_i32_0 : i32, i32
  }
  func.func @transform_2(%arg0: i32) -> (i32, i32) {
    %c0_i32 = arith.constant 0 : i32
    %c0_i32_0 = arith.constant 0 : i32
    %c0_i32_1 = arith.constant 0 : i32
    return %c0_i32, %c0_i32_0 : i32, i32
  }
  func.func @transform_3(%arg0: i32) -> (i32, i32) {
    %c0_i32 = arith.constant 0 : i32
    %c0_i32_0 = arith.constant 0 : i32
    %c0_i32_1 = arith.constant 0 : i32
    return %c0_i32, %c0_i32_0 : i32, i32
  }
  func.func @transform_4(%arg0: i32) -> (i32, i32) {
    %c0_i32 = arith.constant 0 : i32
    %c0_i32_0 = arith.constant 0 : i32
    %c0_i32_1 = arith.constant 0 : i32
    return %c0_i32, %c0_i32_0 : i32, i32
  }
  func.func @transform_5(%arg0: i32) -> (i32, i32) {
    %c0_i32 = arith.constant 0 : i32
    %c0_i32_0 = arith.constant 0 : i32
    return %arg0, %c0_i32 : i32, i32
  }
}

</mosaic_0001>

<llo_original>
// kernel: qmodel_forward.1
$region0: #{qmodel_forward.1}
  #allocation0 [shape = 'u32[]', space=smem, size = 0x4, offset = 0x4, fixed_abs, tag = 'smem constant byte address 0x4 - core index']
  #allocation1 [shape = 'u32[72,128]{1,0:T(1,128)}', space=vmem, size = 0x9000, scoped, tag = 'internal scratch']
  %s0 = inlined_call_operand.vmem [shape: f32[64,16], index: 0, kind: input, shape index: {}]
  %s1 = inlined_call_operand.vmem [shape: f32[16,32], index: 1, kind: input, shape index: {}]
  %s2 = inlined_call_operand.vmem [shape: f32[1,32], index: 2, kind: input, shape index: {}]
  %s3 = inlined_call_operand.vmem [shape: f32[32,4], index: 3, kind: input, shape index: {}]
  %s4 = inlined_call_operand.vmem [shape: f32[1,4], index: 4, kind: input, shape index: {}]
  %s5 = inlined_call_operand.vmem [shape: f32[64,4], index: 5, kind: output, shape index: {}]
  %s6 = sld [smem:[#allocation0]]
  $region53: #{qmodel_forward.1} parent=0
    _
  %s8 = ssub.s32 1, %s6
  %s9 = scalar_select 0, %s8, %s6
  loop: start=0, step=1, limit=4
  $region2: #{qmodel_forward.1} parent=0 // loop_pre_header
    _
  $region3: #{qmodel_forward.1} parent=0 // loop_header
    %s11 = sphi 0, %s15
    %p12 = scmp.ge.s32.totalorder %s11, 4
    %s21 = sphi 0, %s23
    %s24 = sphi 0, %s21
    %s25 = sphi 0, %s24
    %s41 = sphi 0, %s25
    %s45 = sphi 0, %s45
    %s47 = sphi 0, %s45
    %s48 = sphi 0, %s47
    %s62 = sphi 0, %s48
    %s66 = sphi 0, %s66
    %s68 = sphi 0, %s66
    %s69 = sphi 0, %s68
    %s83 = sphi 0, %s69
    %s87 = sphi 0, %s87
    %s89 = sphi 0, %s87
    %s90 = sphi 0, %s89
    %s104 = sphi 0, %s90
    %s108 = sphi 0, %s108
    %s110 = sphi 0, %s108
    %s111 = sphi 0, %s110
    %s125 = sphi 0, %s111
    %s131 = sphi 0, %s133
    %s134 = sphi 0, %s131
    %s135 = sphi 0, %s134
    %s151 = sphi 0, %s135
  $region4: #{qmodel_forward.1} parent=0 // loop_header_branch
    %14 = sbr.rel (%p12) target = $region8
  $region5: #{qmodel_forward.1} parent=0 // loop_body
    %s16 = ssub.s32 %s11, 1
    %s17 = ssub.s32 %s11, 2
    %s18 = sadd.s32 %s11, 1
    %s19 = ssub.s32 %s11, %s18
    %p20 = scmp.eq.s32.totalorder %s19, 0
    %s22 = sadd.s32 %s21, 1
    %s23 = scalar_select %p20, %s21, %s22
    %p26 = pneg %p20
    %p27 = scmp.eq.s32.totalorder %s11, 1
    %p28 = por %p26, %p27
    %p29 = scmp.ne.s32.totalorder %s21, %s24
    %p30 = scmp.eq.s32.totalorder %s11, 0
    %p31 = por %p29, %p30
    %p32 = scmp.ne.s32.totalorder %s21, %s24
    %p33 = scmp.eq.s32.totalorder %s16, 1
    %p34 = por %p32, %p33
    %p35 = scmp.ne.s32.totalorder %s24, %s25
    %p36 = scmp.eq.s32.totalorder %s16, 0
    %p37 = por %p35, %p36
    %p38 = scmp.ne.s32.totalorder %s24, %s25
    %p39 = scmp.eq.s32.totalorder %s17, 1
    %p40 = por %p38, %p39
    %p42 = scmp.ne.s32.totalorder %s25, %s41
    %p43 = scmp.eq.s32.totalorder %s17, 0
    %p44 = por %p42, %p43
    %s46 = sadd.s32 %s45, 1
    %p49 = scmp.eq.s32.totalorder %s11, 1
    %p50 = scmp.ne.s32.totalorder %s45, %s47
    %p51 = scmp.eq.s32.totalorder %s11, 0
    %p52 = por %p50, %p51
    %p53 = scmp.ne.s32.totalorder %s45, %s47
    %p54 = scmp.eq.s32.totalorder %s16, 1
    %p55 = por %p53, %p54
    %p56 = scmp.ne.s32.totalorder %s47, %s48
    %p57 = scmp.eq.s32.totalorder %s16, 0
    %p58 = por %p56, %p57
    %p59 = scmp.ne.s32.totalorder %s47, %s48
    %p60 = scmp.eq.s32.totalorder %s17, 1
    %p61 = por %p59, %p60
    %p63 = scmp.ne.s32.totalorder %s48, %s62
    %p64 = scmp.eq.s32.totalorder %s17, 0
    %p65 = por %p63, %p64
    %s67 = sadd.s32 %s66, 1
    %p70 = scmp.eq.s32.totalorder %s11, 1
    %p71 = scmp.ne.s32.totalorder %s66, %s68
    %p72 = scmp.eq.s32.totalorder %s11, 0
    %p73 = por %p71, %p72
    %p74 = scmp.ne.s32.totalorder %s66, %s68
    %p75 = scmp.eq.s32.totalorder %s16, 1
    %p76 = por %p74, %p75
    %p77 = scmp.ne.s32.totalorder %s68, %s69
    %p78 = scmp.eq.s32.totalorder %s16, 0
    %p79 = por %p77, %p78
    %p80 = scmp.ne.s32.totalorder %s68, %s69
    %p81 = scmp.eq.s32.totalorder %s17, 1
    %p82 = por %p80, %p81
    %p84 = scmp.ne.s32.totalorder %s69, %s83
    %p85 = scmp.eq.s32.totalorder %s17, 0
    %p86 = por %p84, %p85
    %s88 = sadd.s32 %s87, 1
    %p91 = scmp.eq.s32.totalorder %s11, 1
    %p92 = scmp.ne.s32.totalorder %s87, %s89
    %p93 = scmp.eq.s32.totalorder %s11, 0
    %p94 = por %p92, %p93
    %p95 = scmp.ne.s32.totalorder %s87, %s89
    %p96 = scmp.eq.s32.totalorder %s16, 1
    %p97 = por %p95, %p96
    %p98 = scmp.ne.s32.totalorder %s89, %s90
    %p99 = scmp.eq.s32.totalorder %s16, 0
    %p100 = por %p98, %p99
    %p101 = scmp.ne.s32.totalorder %s89, %s90
    %p102 = scmp.eq.s32.totalorder %s17, 1
    %p103 = por %p101, %p102
    %p105 = scmp.ne.s32.totalorder %s90, %s104
    %p106 = scmp.eq.s32.totalorder %s17, 0
    %p107 = por %p105, %p106
    %s109 = sadd.s32 %s108, 1
    %p112 = scmp.eq.s32.totalorder %s11, 1
    %p113 = scmp.ne.s32.totalorder %s108, %s110
    %p114 = scmp.eq.s32.totalorder %s11, 0
    %p115 = por %p113, %p114
    %p116 = scmp.ne.s32.totalorder %s108, %s110
    %p117 = scmp.eq.s32.totalorder %s16, 1
    %p118 = por %p116, %p117
    %p119 = scmp.ne.s32.totalorder %s110, %s111
    %p120 = scmp.eq.s32.totalorder %s16, 0
    %p121 = por %p119, %p120
    %p122 = scmp.ne.s32.totalorder %s110, %s111
    %p123 = scmp.eq.s32.totalorder %s17, 1
    %p124 = por %p122, %p123
    %p126 = scmp.ne.s32.totalorder %s111, %s125
    %p127 = scmp.eq.s32.totalorder %s17, 0
    %p128 = por %p126, %p127
    %s129 = ssub.s32 %s11, %s18
    %p130 = scmp.eq.s32.totalorder %s129, 0
    %s132 = sadd.s32 %s131, 1
    %s133 = scalar_select %p130, %s131, %s132
    %p136 = pneg %p130
    %p137 = scmp.eq.s32.totalorder %s11, 1
    %p138 = por %p136, %p137
    %p139 = scmp.ne.s32.totalorder %s131, %s134
    %p140 = scmp.eq.s32.totalorder %s11, 0
    %p141 = por %p139, %p140
    %p142 = scmp.ne.s32.totalorder %s131, %s134
    %p143 = scmp.eq.s32.totalorder %s16, 1
    %p144 = por %p142, %p143
    %p145 = scmp.ne.s32.totalorder %s134, %s135
    %p146 = scmp.eq.s32.totalorder %s16, 0
    %p147 = por %p145, %p146
    %p148 = scmp.ne.s32.totalorder %s134, %s135
    %p149 = scmp.eq.s32.totalorder %s17, 1
    %p150 = por %p148, %p149
    %p152 = scmp.ne.s32.totalorder %s135, %s151
    %p153 = scmp.eq.s32.totalorder %s17, 0
    %p154 = por %p152, %p153
    %p155 = scmp.le.s32.totalorder 1, %s11
    %p156 = scmp.lt.s32.totalorder %s11, 3
    %p157 = pnand %p155, %p156
    %p158 = pneg %p157
    // Predicated region
    $region9: #{qmodel_forward.1} parent=5 // pred_check
      _
    $region10: #{qmodel_forward.1} parent=5 // pred_check_branch
      %160 = sbr.rel (%p157) target = $region12
    $region11: #{qmodel_forward.1} parent=5 // pred_region
      %s161 = ssub.s32 %s11, 1
      // Predicated region
      $region13: #{qmodel_forward.1} parent=11 // pred_check
        %p162 = pneg %p58
      $region14: #{qmodel_forward.1} parent=11 // pred_check_branch
        %164 = sbr.rel (%p162) target = $region16
      $region15: #{qmodel_forward.1} parent=11 // pred_region
        _
      $region16: #{qmodel_forward.1} parent=11 // pred_fallthru
        _
      // Predicated region
      $region17: #{qmodel_forward.1} parent=11 // pred_check
        %p165 = pneg %p79
      $region18: #{qmodel_forward.1} parent=11 // pred_check_branch
        %167 = sbr.rel (%p165) target = $region20
      $region19: #{qmodel_forward.1} parent=11 // pred_region
        _
      $region20: #{qmodel_forward.1} parent=11 // pred_fallthru
        _
      // Predicated region
      $region21: #{qmodel_forward.1} parent=11 // pred_check
        %p168 = pneg %p100
      $region22: #{qmodel_forward.1} parent=11 // pred_check_branch
        %170 = sbr.rel (%p168) target = $region24
      $region23: #{qmodel_forward.1} parent=11 // pred_region
        _
      $region24: #{qmodel_forward.1} parent=11 // pred_fallthru
        _
      // Predicated region
      $region25: #{qmodel_forward.1} parent=11 // pred_check
        %p171 = pneg %p121
      $region26: #{qmodel_forward.1} parent=11 // pred_check_branch
        %173 = sbr.rel (%p171) target = $region28
      $region27: #{qmodel_forward.1} parent=11 // pred_region
        _
      $region28: #{qmodel_forward.1} parent=11 // pred_fallthru
        _
    $region12: #{qmodel_forward.1} parent=5 // pred_fallthru
      _
    %p174 = scmp.lt.s32.totalorder %s11, 2
    // Predicated region
    $region29: #{qmodel_forward.1} parent=5 // pred_check
      %p175 = pneg %p174
    $region30: #{qmodel_forward.1} parent=5 // pred_check_branch
      %177 = sbr.rel (%p175) target = $region32
    $region31: #{qmodel_forward.1} parent=5 // pred_region
      // Predicated region
      $region33: #{qmodel_forward.1} parent=31 // pred_check
        %p178 = pneg %p31
      $region34: #{qmodel_forward.1} parent=31 // pred_check_branch
        %180 = sbr.rel (%p178) target = $region36
      $region35: #{qmodel_forward.1} parent=31 // pred_region
        %s181 = smul.u32 4, %s11
        %p182 = scmp.lt.s32.totalorder %s181, 7
        %s183 = scalar_select %p182, %s181, 7
        %s184 = smul.addr %s183, 8
        %s185 = scalar_lea.vmem %s0, %s184
        %s186 = smul.u32 4, %s11
      $region36: #{qmodel_forward.1} parent=31 // pred_fallthru
        _
    $region32: #{qmodel_forward.1} parent=5 // pred_fallthru
      _
    %p187 = scmp.le.s32.totalorder 1, %s11
    %p188 = scmp.lt.s32.totalorder %s11, 3
    %p189 = pnand %p187, %p188
    %p190 = pneg %p189
    // Predicated region
    $region37: #{qmodel_forward.1} parent=5 // pred_check
      _
    $region38: #{qmodel_forward.1} parent=5 // pred_check_branch
      %192 = sbr.rel (%p189) target = $region40
    $region39: #{qmodel_forward.1} parent=5 // pred_region
      %s193 = ssub.s32 %s11, 1
      %s194 = smul.u32 4, %s16
      %p195 = scmp.lt.s32.totalorder %s194, 7
      %s196 = scalar_select %p195, %s194, 7
      %s197 = smul.addr %s196, 8
      %s198 = scalar_lea.vmem %s0, %s197
      %p199 = pneg %p37
      %p200 = pneg %p34
      %p201 = pneg %p58
      %p202 = pneg %p55
      %p203 = pneg %p79
      %p204 = pneg %p76
      %p205 = pneg %p100
      %p206 = pneg %p97
      %p207 = pneg %p121
      %p208 = pneg %p118
      %p209 = pneg %p147
      %p210 = pneg %p144
      %s211 = smul.u32 4, %s16
      %p212 = scmp.lt.s32.totalorder %s211, 7
      %s213 = scalar_select %p212, %s211, 7
      %s214 = smul.addr %s213, 8
      %s215 = scalar_lea.vmem %s5, %s214
      %s216 = smul.u32 4, %s16
      %p217 = scmp.lt.s32.totalorder %s216, 7
      %s218 = scalar_select %p217, %s216, 7
      %s219 = smul.addr %s218, 8
      %s220 = scalar_lea.vmem %s0, %s219
      %s221 = smul.u32 4, %s16
      %s222 = smul.u32 4, %s16
      %p223 = scmp.lt.s32.totalorder %s222, 7
      %s224 = scalar_select %p223, %s222, 7
      %s225 = smul.addr %s224, 8
      %s226 = scalar_lea.vmem %s5, %s225
      %s227 = smul.u32 4, %s16
      %v228 = vld [vmem:[%s220] sm:$0xff]
      %v229 = vld [vmem:[%s220 + $0x8] sm:$0xff]
      %v230 = vld [vmem:[%s220 + $0x10] sm:$0xff]
      %v231 = vld [vmem:[%s220 + $0x18] sm:$0xff]
      %v232 = vld [vmem:[%s1] sm:$0xff]
      %v233 = vld [vmem:[%s1 + $0x8] sm:$0xff]
      %v234 = vld [vmem:[%s2] sm:$0x1]
      %v236 = vperm.slane %v234, 0
      %vm238 = vcmask 130048
      %v240 = vsel %vm238, %v228, 0
      %v243 = vsel %vm238, %v229, 0
      %v246 = vsel %vm238, %v230, 0
      %v249 = vsel %vm238, %v231, 0
      %251 = vmatpush.msra.mxu0 0.0
      %252 = vmatpush.msra.mxu0 0.0
      %253 = vmatpush.msra.mxu0 0.0
      %254 = vmatpush.msra.mxu0 0.0
      %255 = vmatpush.msra.mxu0 0.0
      %256 = vmatpush.msra.mxu0 0.0
      %257 = vmatpush.msra.mxu0 0.0
      %258 = vmatpush.msra.mxu0 0.0
      %259 = vmatpush.msra.mxu0 0.0
      %260 = vmatpush.msra.mxu0 0.0
      %261 = vmatpush.msra.mxu0 0.0
      %262 = vmatpush.msra.mxu0 0.0
      %263 = vmatpush.msra.mxu0 0.0
      %264 = vmatpush.msra.mxu0 0.0
      %265 = vmatpush.msra.mxu0 %v233
      %266 = vmatpush.msra.mxu0 %v232
      %267 = vmatmul.f32.gmra.mxu0 %v240
      %v268 = vpop.f32.mrf.mxu0
      %v269 = vadd.f32 %v236, %v268
      %270 = vmatmul.f32.gmra.mxu0 %v243
      %v271 = vpop.f32.mrf.mxu0
      %v272 = vadd.f32 %v236, %v271
      %273 = vmatmul.f32.gmra.mxu0 %v246
      %v274 = vpop.f32.mrf.mxu0
      %v275 = vadd.f32 %v236, %v274
      %276 = vmatmul.f32.gmra.mxu0 %v249
      %v277 = vpop.f32.mrf.mxu0
      %v278 = vadd.f32 %v236, %v277
      %279 = vdwg.mxu0
      %vm280 = vcmp.gt.f32.partialorder %v269, 0.0
      %vm281 = vcmp.gt.f32.partialorder %v272, 0.0
      %vm282 = vcmp.gt.f32.partialorder %v275, 0.0
      %vm283 = vcmp.gt.f32.partialorder %v278, 0.0
      %v284 = vmul.f32 %v269, 0.01
      %v285 = vmul.f32 %v272, 0.01
      %v286 = vmul.f32 %v275, 0.01
      %v287 = vmul.f32 %v278, 0.01
      %v288 = vsel %vm280, %v269, %v284
      %v289 = vsel %vm281, %v272, %v285
      %v290 = vsel %vm282, %v275, %v286
      %v291 = vsel %vm283, %v278, %v287
      %v292 = vld [vmem:[%s3] sm:$0xff]
      %v293 = vld [vmem:[%s3 + $0x8] sm:$0xff]
      %v294 = vld [vmem:[%s3 + $0x10] sm:$0xff]
      %v295 = vld [vmem:[%s3 + $0x18] sm:$0xff]
      %v296 = vld [vmem:[%s4] sm:$0x1]
      %v298 = vperm.slane %v296, 0
      %vm300 = vcmask 261120
      %v302 = vsel %vm300, %v288, 0
      %v305 = vsel %vm300, %v289, 0
      %v308 = vsel %vm300, %v290, 0
      %v311 = vsel %vm300, %v291, 0
      %313 = vmatpush.msra.mxu0 0.0
      %314 = vmatpush.msra.mxu0 0.0
      %315 = vmatpush.msra.mxu0 0.0
      %316 = vmatpush.msra.mxu0 0.0
      %317 = vmatpush.msra.mxu0 0.0
      %318 = vmatpush.msra.mxu0 0.0
      %319 = vmatpush.msra.mxu0 0.0
      %320 = vmatpush.msra.mxu0 0.0
      %321 = vmatpush.msra.mxu0 0.0
      %322 = vmatpush.msra.mxu0 0.0
      %323 = vmatpush.msra.mxu0 0.0
      %324 = vmatpush.msra.mxu0 0.0
      %325 = vmatpush.msra.mxu0 %v295
      %326 = vmatpush.msra.mxu0 %v294
      %327 = vmatpush.msra.mxu0 %v293
      %328 = vmatpush.msra.mxu0 %v292
      %329 = vmatmul.f32.gmra.mxu0 %v302
      %v330 = vpop.f32.mrf.mxu0
      %v331 = vadd.f32 %v298, %v330
      %332 = vmatmul.f32.gmra.mxu0 %v305
      %v333 = vpop.f32.mrf.mxu0
      %v334 = vadd.f32 %v298, %v333
      %335 = vmatmul.f32.gmra.mxu0 %v308
      %v336 = vpop.f32.mrf.mxu0
      %v337 = vadd.f32 %v298, %v336
      %338 = vmatmul.f32.gmra.mxu0 %v311
      %v339 = vpop.f32.mrf.mxu0
      %v340 = vadd.f32 %v298, %v339
      %341 = vdwg.mxu0
      %vm342 = vcmask 31744
      %343 = vst.msk [vmem:[%s226] sm:$0xff] %vm342, %v331
      %344 = vst.msk [vmem:[%s226 + $0x8] sm:$0xff] %vm342, %v334
      %345 = vst.msk [vmem:[%s226 + $0x10] sm:$0xff] %vm342, %v337
      %346 = vst.msk [vmem:[%s226 + $0x18] sm:$0xff] %vm342, %v340
      %s347 = smul.u32 4, %s16
      %p348 = scmp.lt.s32.totalorder %s347, 7
      %s349 = scalar_select %p348, %s347, 7
      %s350 = smul.addr %s349, 8
      %s351 = scalar_lea.vmem %s5, %s350
      // Predicated region
      $region41: #{qmodel_forward.1} parent=39 // pred_check
        %p352 = pneg %p144
      $region42: #{qmodel_forward.1} parent=39 // pred_check_branch
        %354 = sbr.rel (%p352) target = $region44
      $region43: #{qmodel_forward.1} parent=39 // pred_region
        %s355 = smul.u32 4, %s16
      $region44: #{qmodel_forward.1} parent=39 // pred_fallthru
        _
    $region40: #{qmodel_forward.1} parent=5 // pred_fallthru
      _
    %p356 = scmp.le.s32.totalorder 2, %s11
    // Predicated region
    $region45: #{qmodel_forward.1} parent=5 // pred_check
      %p357 = pneg %p356
    $region46: #{qmodel_forward.1} parent=5 // pred_check_branch
      %359 = sbr.rel (%p357) target = $region48
    $region47: #{qmodel_forward.1} parent=5 // pred_region
      %s360 = ssub.s32 %s11, 2
      // Predicated region
      $region49: #{qmodel_forward.1} parent=47 // pred_check
        %p361 = pneg %p150
      $region50: #{qmodel_forward.1} parent=47 // pred_check_branch
        %363 = sbr.rel (%p361) target = $region52
      $region51: #{qmodel_forward.1} parent=47 // pred_region
        %s364 = smul.u32 4, %s17
        %p365 = scmp.lt.s32.totalorder %s364, 7
        %s366 = scalar_select %p365, %s364, 7
        %s367 = smul.addr %s366, 8
        %s368 = scalar_lea.vmem %s5, %s367
      $region52: #{qmodel_forward.1} parent=47 // pred_fallthru
        _
    $region48: #{qmodel_forward.1} parent=5 // pred_fallthru
      _
  $region6: #{qmodel_forward.1} parent=0 // loop_footer
    %s15 = sadd.s32 1, %s11
  $region7: #{qmodel_forward.1} parent=0 // loop_footer_branch
    %10 = sbr.rel target = $region3
  $region8: #{qmodel_forward.1} parent=0 // loop_exit
    _

</llo_original>
